<compile_context>
chip_gen: v5e
topology: v5e:2x2
jax: 0.10.0
libtpu: 0.0.40
codegen_flags: <defaults>
</compile_context>

<pallas_src>
import functools

import jax
import jax.numpy as jnp
from jax.experimental import pallas as pl
from jax.experimental.pallas import tpu as pltpu

LN_EPS = 1e-5


def _ffn_kernel(x_ref, gamma_ref, beta_ref, w1_ref, b1_ref, w2_ref, b2_ref,
                o_ref, xn_ref, acc_ref, *, if_resi, matmul_dtype):
    """Grid = (row_tiles, f_tiles).  Per (i, j): one F-chunk of the FFN for one row tile."""
    j = pl.program_id(1)

    @pl.when(j == 0)
    def _init():
        # LayerNorm over the channel dim (biased variance, eps=1e-5), computed once
        # per row tile and cached in VMEM for the remaining F-chunks.
        x = x_ref[...].astype(jnp.float32)
        mean = jnp.mean(x, axis=-1, keepdims=True)
        var = jnp.mean((x - mean) * (x - mean), axis=-1, keepdims=True)
        xn = (x - mean) * jax.lax.rsqrt(var + LN_EPS)
        xn_ref[...] = (xn * gamma_ref[...].astype(jnp.float32)
                       + beta_ref[...].astype(jnp.float32))
        # Fold the fc2 bias (and the residual, if enabled) into the accumulator init.
        b2 = b2_ref[...].astype(jnp.float32)
        if if_resi:
            acc_ref[...] = x + b2
        else:
            acc_ref[...] = jnp.zeros_like(acc_ref) + b2

    # fc1 chunk: (TM, D) @ (D, TF) -> relu -> (TM, TF); fc2 chunk: (TM, TF) @ (TF, D).
    # Matmul operands optionally in bf16; bias/ReLU/accumulate stay in f32.
    xn = xn_ref[...].astype(matmul_dtype)
    h = jnp.dot(xn, w1_ref[...].astype(matmul_dtype),
                preferred_element_type=jnp.float32)
    h = jnp.maximum(h + b1_ref[...].astype(jnp.float32), 0.0)
    acc_ref[...] += jnp.dot(h.astype(matmul_dtype), w2_ref[...].astype(matmul_dtype),
                            preferred_element_type=jnp.float32)

    @pl.when(j == pl.num_programs(1) - 1)
    def _finalize():
        o_ref[...] = acc_ref[...].astype(o_ref.dtype)


def _round_up(a, m):
    return (a + m - 1) // m * m


def _pick_f_tile(F, requested):
    if requested is not None:
        assert F % requested == 0, "f_tile must divide FFN_channel"
        assert requested == F or requested % 128 == 0, "f_tile must be lane-aligned"
        return requested
    for cand in (1024, 512, 256, 128):   # cap chunk size so v7x's 64 MiB VMEM is safe
        if F % cand == 0:
            return cand
    return F  # small / odd F: keep the whole hidden dim as one chunk


def feedforward_pallas(x, gamma, beta, w1, b1, w2, b2, *,
                       if_resi=True, tile_rows=256, f_tile=None, matmul_dtype=None):
    """x: (B, S, D). Weights: w1 (D, F), w2 (F, D) (transposed PyTorch Linear weights)."""
    B, S, D = x.shape
    F = w1.shape[1]
    N = B * S

    # Row tiling: big tiles for MXU utilisation, padded to a multiple of 8 sublanes.
    tm = _round_up(min(tile_rows, _round_up(N, 8)), 8)
    Np = _round_up(N, tm)
    tf = _pick_f_tile(F, f_tile)
    if matmul_dtype is None:
        matmul_dtype = w1.dtype

    x2 = x.reshape(N, D)
    if Np != N:
        x2 = jnp.pad(x2, ((0, Np - N), (0, 0)))
    gamma2 = gamma.reshape(1, D)
    beta2 = beta.reshape(1, D)
    b1_2 = b1.reshape(1, F)
    b2_2 = b2.reshape(1, D)

    grid = (Np // tm, F // tf)

    # VMEM / cost bookkeeping.
    itx = jnp.dtype(x.dtype).itemsize
    itw = jnp.dtype(w1.dtype).itemsize
    vmem_needed = 2 * (tm * D * itx                       # x tile (double-buffered)
                       + 3 * D * 4 + tf * 4               # gamma, beta, b2, b1 chunk
                       + D * tf * itw + tf * D * itw      # w1 / w2 chunks
                       + tm * D * itx)                    # output tile
    vmem_needed += 2 * tm * D * 4                         # xn + acc scratch
    compiler_kwargs = {"dimension_semantics": ("parallel", "arbitrary")}
    if vmem_needed > (28 << 20):
        # TODO(synk): re-derive tm / f_tile per chip generation if this ever nears
        # v7x's 64 MiB physical VMEM; defaults here stay well under it.
        compiler_kwargs["vmem_limit_bytes"] = int(min(vmem_needed * 5 // 4 + (4 << 20),
                                                      96 << 20))

    cost = pl.CostEstimate(
        flops=4 * Np * D * F + 10 * Np * D,
        transcendentals=Np,  # one rsqrt per row
        bytes_accessed=(2 * Np * D * itx
                        + (D * F + F * D) * itw * (Np // tm)
                        + (2 * D + F) * 4),
    )

    kernel = functools.partial(_ffn_kernel, if_resi=bool(if_resi),
                               matmul_dtype=matmul_dtype)

    out = pl.pallas_call(
        kernel,
        out_shape=jax.ShapeDtypeStruct((Np, D), x.dtype),
        grid_spec=pltpu.PrefetchScalarGridSpec(
            num_scalar_prefetch=0,
            grid=grid,
            in_specs=[
                pl.BlockSpec((tm, D), lambda i, j: (i, 0)),    # x rows (resident across j)
                pl.BlockSpec((1, D), lambda i, j: (0, 0)),     # gamma
                pl.BlockSpec((1, D), lambda i, j: (0, 0)),     # beta
                pl.BlockSpec((D, tf), lambda i, j: (0, j)),    # w1 chunk
                pl.BlockSpec((1, tf), lambda i, j: (0, j)),    # b1 chunk
                pl.BlockSpec((tf, D), lambda i, j: (j, 0)),    # w2 chunk
                pl.BlockSpec((1, D), lambda i, j: (0, 0)),     # b2
            ],
            out_specs=pl.BlockSpec((tm, D), lambda i, j: (i, 0)),
            scratch_shapes=[
                pltpu.VMEM((tm, D), jnp.float32),              # cached post-LN activations
                pltpu.VMEM((tm, D), jnp.float32),              # f32 output accumulator
            ],
        ),
        compiler_params=pltpu.CompilerParams(**compiler_kwargs),
        cost_estimate=cost,
    )(x2, gamma2, beta2, w1, b1_2, w2, b2_2)

    return out[:N].reshape(B, S, D)


def _ref_feedforward(x, gamma, beta, w1, b1, w2, b2, if_resi=True):
    xf = x.astype(jnp.float32)
    mean = jnp.mean(xf, axis=-1, keepdims=True)
    var = jnp.mean((xf - mean) ** 2, axis=-1, keepdims=True)
    xn = (xf - mean) * jax.lax.rsqrt(var + LN_EPS) * gamma + beta
    h = jnp.maximum(xn @ w1 + b1, 0.0)
    y = h @ w2 + b2
    if if_resi:
        y = y + xf
    return y.astype(x.dtype)


if __name__ == "__main__":
    # Small but lane-friendly shapes: (batch, seq, in_channel), FFN hidden = 2*in_channel.
    B, S, D, F = 2, 8, 128, 256

    key = jax.random.PRNGKey(0)
    kx, kw1, kb1, kw2, kb2, kg, kbt = jax.random.split(key, 7)

    x = jax.random.normal(kx, (B, S, D), dtype=jnp.float32)

    # PyTorch-Linear-style uniform init (weights given as (in, out) = W^T).
    bound1 = 1.0 / (D ** 0.5)
    bound2 = 1.0 / (F ** 0.5)
    w1 = jax.random.uniform(kw1, (D, F), minval=-bound1, maxval=bound1, dtype=jnp.float32)
    b1 = jax.random.uniform(kb1, (F,), minval=-bound1, maxval=bound1, dtype=jnp.float32)
    w2 = jax.random.uniform(kw2, (F, D), minval=-bound2, maxval=bound2, dtype=jnp.float32)
    b2 = jax.random.uniform(kb2, (D,), minval=-bound2, maxval=bound2, dtype=jnp.float32)
    # Non-trivial LayerNorm affine params to exercise that path.
    gamma = (1.0 + 0.1 * jax.random.normal(kg, (D,))).astype(jnp.float32)
    beta = (0.1 * jax.random.normal(kbt, (D,))).astype(jnp.float32)

    ref = _ref_feedforward(x, gamma, beta, w1, b1, w2, b2)

    # f32 matmul path (strict accuracy); f_tile=128 exercises the F-chunk accumulation.
    out = feedforward_pallas(x, gamma, beta, w1, b1, w2, b2,
                             tile_rows=256, f_tile=128)
    out = jax.block_until_ready(out)
    assert out.shape == (B, S, D)
    assert jnp.allclose(out, ref, atol=1e-4, rtol=1e-4), "f32 path mismatch vs reference"

    # bf16 matmul-operand path (perf mode); LN / bias / residual / accumulation stay f32.
    out_bf16 = feedforward_pallas(x, gamma, beta, w1, b1, w2, b2,
                                  tile_rows=256, f_tile=128,
                                  matmul_dtype=jnp.bfloat16)
    out_bf16 = jax.block_until_ready(out_bf16)
    assert jnp.allclose(out_bf16, ref, atol=1e-1, rtol=1e-1), "bf16 path mismatch vs reference"

    print("KERNEL_OK")
</pallas_src>

<mosaic_0001>
module attributes {stable_mosaic.version = 11 : i64} {
  func.func @_ffn_kernel(%arg0: i32, %arg1: i32, %arg2: memref<16x128xf32, #tpu.memory_space<vmem>>, %arg3: memref<1x128xf32, #tpu.memory_space<vmem>>, %arg4: memref<1x128xf32, #tpu.memory_space<vmem>>, %arg5: memref<128x128xf32, #tpu.memory_space<vmem>>, %arg6: memref<1x128xf32, #tpu.memory_space<vmem>>, %arg7: memref<128x128xf32, #tpu.memory_space<vmem>>, %arg8: memref<1x128xf32, #tpu.memory_space<vmem>>, %arg9: memref<16x128xf32, #tpu.memory_space<vmem>>, %arg10: memref<16x128xf32, #tpu.memory_space<vmem>>, %arg11: memref<16x128xf32, #tpu.memory_space<vmem>>) attributes {dimension_semantics = [#tpu.dimension_semantics<parallel>, #tpu.dimension_semantics<arbitrary>], iteration_bounds = array<i64: 1, 2>, scalar_prefetch = 0 : i64, scratch_operands = 2 : i64, tpu.core_type = #tpu.core_type<tc>, window_params = [{transform_indices = @transform_0, window_bounds = array<i64: 16, 128>}, {pipeline_mode = #tpu.pipeline_mode<synchronous>, transform_indices = @transform_1, window_bounds = array<i64: 1, 128>}, {pipeline_mode = #tpu.pipeline_mode<synchronous>, transform_indices = @transform_2, window_bounds = array<i64: 1, 128>}, {transform_indices = @transform_3, window_bounds = array<i64: 128, 128>}, {transform_indices = @transform_4, window_bounds = array<i64: 1, 128>}, {transform_indices = @transform_5, window_bounds = array<i64: 128, 128>}, {pipeline_mode = #tpu.pipeline_mode<synchronous>, transform_indices = @transform_6, window_bounds = array<i64: 1, 128>}, {transform_indices = @transform_7, window_bounds = array<i64: 16, 128>}]} {
    %c0_i32 = arith.constant 0 : i32
    %0 = arith.cmpi eq, %arg1, %c0_i32 : i32
    %1 = arith.extui %0 : i1 to i32
    %c0_i32_0 = arith.constant 0 : i32
    %2 = arith.cmpi ne, %1, %c0_i32_0 : i32
    scf.if %2 {
      %c0_15 = arith.constant 0 : index
      %c0_16 = arith.constant 0 : index
      %19 = vector.load %arg2[%c0_15, %c0_16] : memref<16x128xf32, #tpu.memory_space<vmem>>, vector<16x128xf32>
      %cst_17 = arith.constant dense<0.000000e+00> : vector<16xf32>
      %20 = vector.multi_reduction <add>, %19, %cst_17 [1] : vector<16x128xf32> to vector<16xf32>
      %21 = vector.shape_cast %20 : vector<16xf32> to vector<16x1xf32>
      %cst_18 = arith.constant 1.280000e+02 : f32
      %22 = vector.broadcast %cst_18 : f32 to vector<16x1xf32>
      %23 = arith.divf %21, %22 : vector<16x1xf32>
      %24 = vector.broadcast %23 : vector<16x1xf32> to vector<16x128xf32>
      %25 = arith.subf %19, %24 : vector<16x128xf32>
      %26 = vector.broadcast %23 : vector<16x1xf32> to vector<16x128xf32>
      %27 = arith.subf %19, %26 : vector<16x128xf32>
      %28 = arith.mulf %25, %27 : vector<16x128xf32>
      %cst_19 = arith.constant dense<0.000000e+00> : vector<16xf32>
      %29 = vector.multi_reduction <add>, %28, %cst_19 [1] : vector<16x128xf32> to vector<16xf32>
      %30 = vector.shape_cast %29 : vector<16xf32> to vector<16x1xf32>
      %cst_20 = arith.constant 1.280000e+02 : f32
      %31 = vector.broadcast %cst_20 : f32 to vector<16x1xf32>
      %32 = arith.divf %30, %31 : vector<16x1xf32>
      %33 = vector.broadcast %23 : vector<16x1xf32> to vector<16x128xf32>
      %34 = arith.subf %19, %33 : vector<16x128xf32>
      %cst_21 = arith.constant 9.99999974E-6 : f32
      %35 = vector.broadcast %cst_21 : f32 to vector<16x1xf32>
      %36 = arith.addf %32, %35 : vector<16x1xf32>
      %37 = math.rsqrt %36 : vector<16x1xf32>
      %38 = vector.broadcast %37 : vector<16x1xf32> to vector<16x128xf32>
      %39 = arith.mulf %34, %38 : vector<16x128xf32>
      %c0_22 = arith.constant 0 : index
      %c0_23 = arith.constant 0 : index
      %40 = vector.load %arg3[%c0_22, %c0_23] : memref<1x128xf32, #tpu.memory_space<vmem>>, vector<1x128xf32>
      %41 = vector.broadcast %40 : vector<1x128xf32> to vector<16x128xf32>
      %42 = arith.mulf %39, %41 : vector<16x128xf32>
      %c0_24 = arith.constant 0 : index
      %c0_25 = arith.constant 0 : index
      %43 = vector.load %arg4[%c0_24, %c0_25] : memref<1x128xf32, #tpu.memory_space<vmem>>, vector<1x128xf32>
      %44 = vector.broadcast %43 : vector<1x128xf32> to vector<16x128xf32>
      %45 = arith.addf %42, %44 : vector<16x128xf32>
      %c0_26 = arith.constant 0 : index
      %c0_27 = arith.constant 0 : index
      %46 = vector.load %arg10[%c0_26, %c0_27] : memref<16x128xf32, #tpu.memory_space<vmem>>, vector<16x128xf32>
      tpu.vector_store %arg10[%c0_26, %c0_27], %45 {strides = array<i32>} : memref<16x128xf32, #tpu.memory_space<vmem>>, vector<16x128xf32>,
      %c0_28 = arith.constant 0 : index
      %c0_29 = arith.constant 0 : index
      %47 = vector.load %arg8[%c0_28, %c0_29] : memref<1x128xf32, #tpu.memory_space<vmem>>, vector<1x128xf32>
      %48 = vector.broadcast %47 : vector<1x128xf32> to vector<16x128xf32>
      %49 = arith.addf %19, %48 : vector<16x128xf32>
      %c0_30 = arith.constant 0 : index
      %c0_31 = arith.constant 0 : index
      %50 = vector.load %arg11[%c0_30, %c0_31] : memref<16x128xf32, #tpu.memory_space<vmem>>, vector<16x128xf32>
      tpu.vector_store %arg11[%c0_30, %c0_31], %49 {strides = array<i32>} : memref<16x128xf32, #tpu.memory_space<vmem>>, vector<16x128xf32>,
    } else {
    }
    %c0 = arith.constant 0 : index
    %c0_1 = arith.constant 0 : index
    %3 = vector.load %arg10[%c0, %c0_1] : memref<16x128xf32, #tpu.memory_space<vmem>>, vector<16x128xf32>
    %c0_2 = arith.constant 0 : index
    %c0_3 = arith.constant 0 : index
    %4 = vector.load %arg5[%c0_2, %c0_3] : memref<128x128xf32, #tpu.memory_space<vmem>>, vector<128x128xf32>
    %cst = arith.constant dense<0.000000e+00> : vector<16x128xf32>
    %5 = tpu.matmul %3, %4, %cst {dimension_numbers = #tpu.dot_dimension_numbers<[1], [0], [0], [1], [0, 0, 1, 1], [], []>} : vector<16x128xf32>, vector<128x128xf32>, vector<16x128xf32> -> vector<16x128xf32>
    %c0_4 = arith.constant 0 : index
    %c0_5 = arith.constant 0 : index
    %6 = vector.load %arg6[%c0_4, %c0_5] : memref<1x128xf32, #tpu.memory_space<vmem>>, vector<1x128xf32>
    %7 = vector.broadcast %6 : vector<1x128xf32> to vector<16x128xf32>
    %8 = arith.addf %5, %7 : vector<16x128xf32>
    %cst_6 = arith.constant 0.000000e+00 : f32
    %9 = vector.broadcast %cst_6 : f32 to vector<16x128xf32>
    %10 = arith.maximumf %8, %9 : vector<16x128xf32>
    %c0_7 = arith.constant 0 : index
    %c0_8 = arith.constant 0 : index
    %11 = vector.load %arg11[%c0_7, %c0_8] : memref<16x128xf32, #tpu.memory_space<vmem>>, vector<16x128xf32>
    %c0_9 = arith.constant 0 : index
    %c0_10 = arith.constant 0 : index
    %12 = vector.load %arg7[%c0_9, %c0_10] : memref<128x128xf32, #tpu.memory_space<vmem>>, vector<128x128xf32>
    %cst_11 = arith.constant dense<0.000000e+00> : vector<16x128xf32>
    %13 = tpu.matmul %10, %12, %cst_11 {dimension_numbers = #tpu.dot_dimension_numbers<[1], [0], [0], [1], [0, 0, 1, 1], [], []>} : vector<16x128xf32>, vector<128x128xf32>, vector<16x128xf32> -> vector<16x128xf32>
    %14 = arith.addf %11, %13 : vector<16x128xf32>
    %c0_12 = arith.constant 0 : index
    %c0_13 = arith.constant 0 : index
    %15 = vector.load %arg11[%c0_12, %c0_13] : memref<16x128xf32, #tpu.memory_space<vmem>>, vector<16x128xf32>
    tpu.vector_store %arg11[%c0_12, %c0_13], %14 {strides = array<i32>} : memref<16x128xf32, #tpu.memory_space<vmem>>, vector<16x128xf32>,
    %c1_i32 = arith.constant 1 : i32
    %16 = arith.cmpi eq, %arg1, %c1_i32 : i32
    %17 = arith.extui %16 : i1 to i32
    %c0_i32_14 = arith.constant 0 : i32
    %18 = arith.cmpi ne, %17, %c0_i32_14 : i32
    scf.if %18 {
      %c0_15 = arith.constant 0 : index
      %c0_16 = arith.constant 0 : index
      %19 = vector.load %arg11[%c0_15, %c0_16] : memref<16x128xf32, #tpu.memory_space<vmem>>, vector<16x128xf32>
      %c0_17 = arith.constant 0 : index
      %c0_18 = arith.constant 0 : index
      %20 = vector.load %arg9[%c0_17, %c0_18] : memref<16x128xf32, #tpu.memory_space<vmem>>, vector<16x128xf32>
      tpu.vector_store %arg9[%c0_17, %c0_18], %19 {strides = array<i32>} : memref<16x128xf32, #tpu.memory_space<vmem>>, vector<16x128xf32>,
    } else {
    }
    return
  }
  func.func @transform_0(%arg0: i32, %arg1: i32) -> (i32, i32) {
    %c0_i32 = arith.constant 0 : i32
    %c0_i32_0 = arith.constant 0 : i32
    return %arg0, %c0_i32 : i32, i32
  }
  func.func @transform_1(%arg0: i32, %arg1: i32) -> (i32, i32) {
    %c0_i32 = arith.constant 0 : i32
    %c0_i32_0 = arith.constant 0 : i32
    %c0_i32_1 = arith.constant 0 : i32
    return %c0_i32, %c0_i32_0 : i32, i32
  }
  func.func @transform_2(%arg0: i32, %arg1: i32) -> (i32, i32) {
    %c0_i32 = arith.constant 0 : i32
    %c0_i32_0 = arith.constant 0 : i32
    %c0_i32_1 = arith.constant 0 : i32
    return %c0_i32, %c0_i32_0 : i32, i32
  }
  func.func @transform_3(%arg0: i32, %arg1: i32) -> (i32, i32) {
    %c0_i32 = arith.constant 0 : i32
    %c0_i32_0 = arith.constant 0 : i32
    return %c0_i32, %arg1 : i32, i32
  }
  func.func @transform_4(%arg0: i32, %arg1: i32) -> (i32, i32) {
    %c0_i32 = arith.constant 0 : i32
    %c0_i32_0 = arith.constant 0 : i32
    return %c0_i32, %arg1 : i32, i32
  }
  func.func @transform_5(%arg0: i32, %arg1: i32) -> (i32, i32) {
    %c0_i32 = arith.constant 0 : i32
    %c0_i32_0 = arith.constant 0 : i32
    return %arg1, %c0_i32 : i32, i32
  }
  func.func @transform_6(%arg0: i32, %arg1: i32) -> (i32, i32) {
    %c0_i32 = arith.constant 0 : i32
    %c0_i32_0 = arith.constant 0 : i32
    %c0_i32_1 = arith.constant 0 : i32
    return %c0_i32, %c0_i32_0 : i32, i32
  }
  func.func @transform_7(%arg0: i32, %arg1: i32) -> (i32, i32) {
    %c0_i32 = arith.constant 0 : i32
    %c0_i32_0 = arith.constant 0 : i32
    return %arg0, %c0_i32 : i32, i32
  }
}

</mosaic_0001>

<llo_original>
// kernel: tpu_custom_call.1
$region0: #{tpu_custom_call.1}
  #allocation0 [shape = 'u32[]', space=smem, size = 0x4, offset = 0x4, fixed_abs, tag = 'smem constant byte address 0x4 - core index']
  #allocation1 [shape = 'u32[72,128]{1,0:T(1,128)}', space=vmem, size = 0x9000, scoped, tag = 'internal scratch']
  #allocation2 [shape = 'f32[16,128]{1,0:T(8,128)}', space=vmem, size = 0x2000, scoped, tag = 'scratch operand']
  #allocation3 [shape = 'f32[16,128]{1,0:T(8,128)}', space=vmem, size = 0x2000, scoped, tag = 'scratch operand']
  %s0 = inlined_call_operand.hbm [shape: f32[16,128], index: 0, kind: input, shape index: {}]
  %s1 = inlined_call_operand.hbm [shape: f32[1,128], index: 1, kind: input, shape index: {}]
  %s2 = inlined_call_operand.vmem [shape: f32[1,128], index: 2, kind: input, shape index: {}]
  %s3 = inlined_call_operand.hbm [shape: f32[128,256], index: 3, kind: input, shape index: {}]
  %s4 = inlined_call_operand.vmem [shape: f32[1,256], index: 4, kind: input, shape index: {}]
  %s5 = inlined_call_operand.hbm [shape: f32[256,128], index: 5, kind: input, shape index: {}]
  %s6 = inlined_call_operand.vmem [shape: f32[1,128], index: 6, kind: input, shape index: {}]
  %s7 = inlined_call_operand.hbm [shape: f32[16,128], index: 7, kind: output, shape index: {}]
  %s8 = sld [smem:[#allocation0]]
  $region85: #{tpu_custom_call.1} parent=0
    _
  %s10 = ssub.s32 1, %s8
  %s11 = scalar_select 0, %s10, %s8
  $region1: #{tpu_custom_call.1} parent=0
    #allocation4 [shape = 'u8[8192]{0}', space=vmem, size = 0x2000, scoped, tag = 'input window, operand 0, single buffered']
    #allocation5 [shape = 's32[2]{0}', space=sflag, size = 0x8, scoped, tag = 'scoped memory for tpu_custom_call.1']
    #allocation6 [shape = 's32[2]{0}', space=sflag, size = 0x8, scoped, tag = 'scoped memory for tpu_custom_call.1']
    #allocation7 [shape = 'u8[512]{0}', space=vmem, size = 0x400, scoped, tag = 'input window, operand 1, single buffered']
    #allocation8 [shape = 's32[1]{0}', space=sflag, size = 0x4, scoped, tag = 'scoped memory for tpu_custom_call.1']
    #allocation9 [shape = 'u8[131072]{0}', space=vmem, size = 0x20000, scoped, tag = 'input window, operand 3']
    #allocation10 [shape = 'u8[131072]{0}', space=vmem, size = 0x20000, scoped, tag = 'input window, operand 5']
    #allocation11 [shape = 'u8[8192]{0}', space=vmem, size = 0x2000, scoped, tag = 'output window, operand 0, single buffered']
    %12 = vsyncpa [#allocation5], 0
    %13 = vsyncpa [#allocation8], 0
    %14 = vsyncpa [#allocation6], 0
    loop: start=0, step=1, limit=4
    $region2: #{tpu_custom_call.1} parent=1 // loop_pre_header
      _
    $region3: #{tpu_custom_call.1} parent=1 // loop_header
      %s16 = sphi 0, %s20
      %p17 = scmp.ge.s32.totalorder %s16, 4
      %s23 = sphi 0, %s35
      %s24 = sphi 0, %s31
      %s25 = sphi 0, %s23
      %s26 = sphi 0, %s24
      %s27 = sphi 0, %s25
      %s28 = sphi 0, %s26
      %s38 = sphi 0, %s40
      %s41 = sphi 0, %s38
      %s42 = sphi 0, %s41
      %s58 = sphi 0, %s42
      %s62 = sphi 0, %s62
      %s64 = sphi 0, %s62
      %s65 = sphi 0, %s64
      %s79 = sphi 0, %s65
      %s83 = sphi 0, %s83
      %s85 = sphi 0, %s83
      %s86 = sphi 0, %s85
      %s100 = sphi 0, %s86
      %s106 = sphi 0, %s108
      %s109 = sphi 0, %s106
      %s110 = sphi 0, %s109
      %s126 = sphi 0, %s110
      %s132 = sphi 0, %s134
      %s135 = sphi 0, %s132
      %s136 = sphi 0, %s135
      %s152 = sphi 0, %s136
      %s158 = sphi 0, %s160
      %s161 = sphi 0, %s158
      %s162 = sphi 0, %s161
      %s178 = sphi 0, %s162
      %s182 = sphi 0, %s182
      %s184 = sphi 0, %s182
      %s185 = sphi 0, %s184
      %s199 = sphi 0, %s185
      %s205 = sphi 0, %s207
      %s208 = sphi 0, %s205
      %s209 = sphi 0, %s208
      %s225 = sphi 0, %s209
    $region4: #{tpu_custom_call.1} parent=1 // loop_header_branch
      %19 = sbr.rel (%p17) target = $region8
    $region5: #{tpu_custom_call.1} parent=1 // loop_body
      %s21 = ssub.s32 %s16, 1
      %s22 = ssub.s32 %s16, 2
      %s29 = sadd.s32 1, %s24
      %p30 = scmp.ge.s32.totalorder %s29, 2
      %s31 = scalar_select %p30, 0, %s29
      %s32 = sadd.s32 1, %s23
      %s33 = scalar_select %p30, %s32, %s23
      %p34 = scmp.ge.s32.totalorder %s33, 1
      %s35 = scalar_select %p34, 0, %s33
      %s36 = ssub.s32 %s23, %s35
      %p37 = scmp.eq.s32.totalorder %s36, 0
      %s39 = sadd.s32 %s38, 1
      %s40 = scalar_select %p37, %s38, %s39
      %p43 = pneg %p37
      %p44 = scmp.eq.s32.totalorder %s16, 1
      %p45 = por %p43, %p44
      %p46 = scmp.ne.s32.totalorder %s38, %s41
      %p47 = scmp.eq.s32.totalorder %s16, 0
      %p48 = por %p46, %p47
      %p49 = scmp.ne.s32.totalorder %s38, %s41
      %p50 = scmp.eq.s32.totalorder %s21, 1
      %p51 = por %p49, %p50
      %p52 = scmp.ne.s32.totalorder %s41, %s42
      %p53 = scmp.eq.s32.totalorder %s21, 0
      %p54 = por %p52, %p53
      %p55 = scmp.ne.s32.totalorder %s41, %s42
      %p56 = scmp.eq.s32.totalorder %s22, 1
      %p57 = por %p55, %p56
      %p59 = scmp.ne.s32.totalorder %s42, %s58
      %p60 = scmp.eq.s32.totalorder %s22, 0
      %p61 = por %p59, %p60
      %s63 = sadd.s32 %s62, 1
      %p66 = scmp.eq.s32.totalorder %s16, 1
      %p67 = scmp.ne.s32.totalorder %s62, %s64
      %p68 = scmp.eq.s32.totalorder %s16, 0
      %p69 = por %p67, %p68
      %p70 = scmp.ne.s32.totalorder %s62, %s64
      %p71 = scmp.eq.s32.totalorder %s21, 1
      %p72 = por %p70, %p71
      %p73 = scmp.ne.s32.totalorder %s64, %s65
      %p74 = scmp.eq.s32.totalorder %s21, 0
      %p75 = por %p73, %p74
      %p76 = scmp.ne.s32.totalorder %s64, %s65
      %p77 = scmp.eq.s32.totalorder %s22, 1
      %p78 = por %p76, %p77
      %p80 = scmp.ne.s32.totalorder %s65, %s79
      %p81 = scmp.eq.s32.totalorder %s22, 0
      %p82 = por %p80, %p81
      %s84 = sadd.s32 %s83, 1
      %p87 = scmp.eq.s32.totalorder %s16, 1
      %p88 = scmp.ne.s32.totalorder %s83, %s85
      %p89 = scmp.eq.s32.totalorder %s16, 0
      %p90 = por %p88, %p89
      %p91 = scmp.ne.s32.totalorder %s83, %s85
      %p92 = scmp.eq.s32.totalorder %s21, 1
      %p93 = por %p91, %p92
      %p94 = scmp.ne.s32.totalorder %s85, %s86
      %p95 = scmp.eq.s32.totalorder %s21, 0
      %p96 = por %p94, %p95
      %p97 = scmp.ne.s32.totalorder %s85, %s86
      %p98 = scmp.eq.s32.totalorder %s22, 1
      %p99 = por %p97, %p98
      %p101 = scmp.ne.s32.totalorder %s86, %s100
      %p102 = scmp.eq.s32.totalorder %s22, 0
      %p103 = por %p101, %p102
      %s104 = ssub.s32 %s24, %s31
      %p105 = scmp.eq.s32.totalorder %s104, 0
      %s107 = sadd.s32 %s106, 1
      %s108 = scalar_select %p105, %s106, %s107
      %p111 = pneg %p105
      %p112 = scmp.eq.s32.totalorder %s16, 1
      %p113 = por %p111, %p112
      %p114 = scmp.ne.s32.totalorder %s106, %s109
      %p115 = scmp.eq.s32.totalorder %s16, 0
      %p116 = por %p114, %p115
      %p117 = scmp.ne.s32.totalorder %s106, %s109
      %p118 = scmp.eq.s32.totalorder %s21, 1
      %p119 = por %p117, %p118
      %p120 = scmp.ne.s32.totalorder %s109, %s110
      %p121 = scmp.eq.s32.totalorder %s21, 0
      %p122 = por %p120, %p121
      %p123 = scmp.ne.s32.totalorder %s109, %s110
      %p124 = scmp.eq.s32.totalorder %s22, 1
      %p125 = por %p123, %p124
      %p127 = scmp.ne.s32.totalorder %s110, %s126
      %p128 = scmp.eq.s32.totalorder %s22, 0
      %p129 = por %p127, %p128
      %s130 = ssub.s32 %s24, %s31
      %p131 = scmp.eq.s32.totalorder %s130, 0
      %s133 = sadd.s32 %s132, 1
      %s134 = scalar_select %p131, %s132, %s133
      %p137 = pneg %p131
      %p138 = scmp.eq.s32.totalorder %s16, 1
      %p139 = por %p137, %p138
      %p140 = scmp.ne.s32.totalorder %s132, %s135
      %p141 = scmp.eq.s32.totalorder %s16, 0
      %p142 = por %p140, %p141
      %p143 = scmp.ne.s32.totalorder %s132, %s135
      %p144 = scmp.eq.s32.totalorder %s21, 1
      %p145 = por %p143, %p144
      %p146 = scmp.ne.s32.totalorder %s135, %s136
      %p147 = scmp.eq.s32.totalorder %s21, 0
      %p148 = por %p146, %p147
      %p149 = scmp.ne.s32.totalorder %s135, %s136
      %p150 = scmp.eq.s32.totalorder %s22, 1
      %p151 = por %p149, %p150
      %p153 = scmp.ne.s32.totalorder %s136, %s152
      %p154 = scmp.eq.s32.totalorder %s22, 0
      %p155 = por %p153, %p154
      %s156 = ssub.s32 %s24, %s31
      %p157 = scmp.eq.s32.totalorder %s156, 0
      %s159 = sadd.s32 %s158, 1
      %s160 = scalar_select %p157, %s158, %s159
      %p163 = pneg %p157
      %p164 = scmp.eq.s32.totalorder %s16, 1
      %p165 = por %p163, %p164
      %p166 = scmp.ne.s32.totalorder %s158, %s161
      %p167 = scmp.eq.s32.totalorder %s16, 0
      %p168 = por %p166, %p167
      %p169 = scmp.ne.s32.totalorder %s158, %s161
      %p170 = scmp.eq.s32.totalorder %s21, 1
      %p171 = por %p169, %p170
      %p172 = scmp.ne.s32.totalorder %s161, %s162
      %p173 = scmp.eq.s32.totalorder %s21, 0
      %p174 = por %p172, %p173
      %p175 = scmp.ne.s32.totalorder %s161, %s162
      %p176 = scmp.eq.s32.totalorder %s22, 1
      %p177 = por %p175, %p176
      %p179 = scmp.ne.s32.totalorder %s162, %s178
      %p180 = scmp.eq.s32.totalorder %s22, 0
      %p181 = por %p179, %p180
      %s183 = sadd.s32 %s182, 1
      %p186 = scmp.eq.s32.totalorder %s16, 1
      %p187 = scmp.ne.s32.totalorder %s182, %s184
      %p188 = scmp.eq.s32.totalorder %s16, 0
      %p189 = por %p187, %p188
      %p190 = scmp.ne.s32.totalorder %s182, %s184
      %p191 = scmp.eq.s32.totalorder %s21, 1
      %p192 = por %p190, %p191
      %p193 = scmp.ne.s32.totalorder %s184, %s185
      %p194 = scmp.eq.s32.totalorder %s21, 0
      %p195 = por %p193, %p194
      %p196 = scmp.ne.s32.totalorder %s184, %s185
      %p197 = scmp.eq.s32.totalorder %s22, 1
      %p198 = por %p196, %p197
      %p200 = scmp.ne.s32.totalorder %s185, %s199
      %p201 = scmp.eq.s32.totalorder %s22, 0
      %p202 = por %p200, %p201
      %s203 = ssub.s32 %s23, %s35
      %p204 = scmp.eq.s32.totalorder %s203, 0
      %s206 = sadd.s32 %s205, 1
      %s207 = scalar_select %p204, %s205, %s206
      %p210 = pneg %p204
      %p211 = scmp.eq.s32.totalorder %s16, 1
      %p212 = por %p210, %p211
      %p213 = scmp.ne.s32.totalorder %s205, %s208
      %p214 = scmp.eq.s32.totalorder %s16, 0
      %p215 = por %p213, %p214
      %p216 = scmp.ne.s32.totalorder %s205, %s208
      %p217 = scmp.eq.s32.totalorder %s21, 1
      %p218 = por %p216, %p217
      %p219 = scmp.ne.s32.totalorder %s208, %s209
      %p220 = scmp.eq.s32.totalorder %s21, 0
      %p221 = por %p219, %p220
      %p222 = scmp.ne.s32.totalorder %s208, %s209
      %p223 = scmp.eq.s32.totalorder %s22, 1
      %p224 = por %p222, %p223
      %p226 = scmp.ne.s32.totalorder %s209, %s225
      %p227 = scmp.eq.s32.totalorder %s22, 0
      %p228 = por %p226, %p227
      %p229 = scmp.le.s32.totalorder 1, %s16
      %p230 = scmp.lt.s32.totalorder %s16, 3
      %p231 = pnand %p229, %p230
      %p232 = pneg %p231
      // Predicated region
      $region9: #{tpu_custom_call.1} parent=5 // pred_check
        _
      $region10: #{tpu_custom_call.1} parent=5 // pred_check_branch
        %234 = sbr.rel (%p231) target = $region12
      $region11: #{tpu_custom_call.1} parent=5 // pred_region
        %s235 = ssub.s32 %s16, 1
        // Predicated region
        $region13: #{tpu_custom_call.1} parent=11 // pred_check
          %p236 = pneg %p54
        $region14: #{tpu_custom_call.1} parent=11 // pred_check_branch
          %238 = sbr.rel (%p236) target = $region16
        $region15: #{tpu_custom_call.1} parent=11 // pred_region
          %s239 = smul.u32 2, %s25
          %241 = vsyncadd [#allocation5], 0
          %s242 = smul.addr %s239, 8
          %s243 = scalar_lea.hbm %s0, %s242
          %s244 = sshll.u32 %s243, 4
          %s245 = int_to_ptr.hbm [resolvable:$true] %s244
          %s246 = sshll.u32 [#allocation4], 4
          %s247 = int_to_ptr.vmem [resolvable:$true] %s246
          %252 = dma.hbm_to_vmem [thread:$0]  %s245, 256, %s247, [#allocation5], 128, 128, 8
        $region16: #{tpu_custom_call.1} parent=11 // pred_fallthru
          _
        // Predicated region
        $region17: #{tpu_custom_call.1} parent=11 // pred_check
          %p253 = pneg %p75
        $region18: #{tpu_custom_call.1} parent=11 // pred_check_branch
          %255 = sbr.rel (%p253) target = $region20
        $region19: #{tpu_custom_call.1} parent=11 // pred_region
          %257 = vsyncadd [#allocation8], 0
          %s259 = sshll.u32 %s1, 4
          %s260 = int_to_ptr.hbm [resolvable:$true] %s259
          %s261 = sshll.u32 [#allocation7], 4
          %s262 = int_to_ptr.vmem [resolvable:$true] %s261
          %264 = dma.hbm_to_vmem [thread:$0]  %s260, 16, %s262, [#allocation8]
        $region20: #{tpu_custom_call.1} parent=11 // pred_fallthru
          _
        // Predicated region
        $region21: #{tpu_custom_call.1} parent=11 // pred_check
          %p265 = pneg %p96
        $region22: #{tpu_custom_call.1} parent=11 // pred_check_branch
          %267 = sbr.rel (%p265) target = $region24
        $region23: #{tpu_custom_call.1} parent=11 // pred_region
          _
        $region24: #{tpu_custom_call.1} parent=11 // pred_fallthru
          _
        // Predicated region
        $region25: #{tpu_custom_call.1} parent=11 // pred_check
          %p268 = pneg %p195
        $region26: #{tpu_custom_call.1} parent=11 // pred_check_branch
          %270 = sbr.rel (%p268) target = $region28
        $region27: #{tpu_custom_call.1} parent=11 // pred_region
          _
        $region28: #{tpu_custom_call.1} parent=11 // pred_fallthru
          _
      $region12: #{tpu_custom_call.1} parent=5 // pred_fallthru
        _
      %p271 = scmp.lt.s32.totalorder %s16, 2
      // Predicated region
      $region29: #{tpu_custom_call.1} parent=5 // pred_check
        %p272 = pneg %p271
      $region30: #{tpu_custom_call.1} parent=5 // pred_check_branch
        %274 = sbr.rel (%p272) target = $region32
      $region31: #{tpu_custom_call.1} parent=5 // pred_region
        // Predicated region
        $region33: #{tpu_custom_call.1} parent=31 // pred_check
          %p275 = pneg %p116
        $region34: #{tpu_custom_call.1} parent=31 // pred_check_branch
          %277 = sbr.rel (%p275) target = $region36
        $region35: #{tpu_custom_call.1} parent=31 // pred_region
          %s278 = sand.u32 %s16, 1
          %s279 = scalar_lea.sflag [#allocation5], %s278
          %s280 = sand.u32 %s106, 1
          %s281 = smul.addr %s280, 128
          %s282 = scalar_lea.vmem [#allocation9], %s281
          %284 = vsyncadd %s279, 0
          %s285 = smul.addr %s24, 8
          %s286 = scalar_lea.hbm %s3, %s285
          %s287 = sshll.u32 %s286, 4
          %s288 = int_to_ptr.hbm [resolvable:$true] %s287
          %s289 = sshll.u32 %s282, 4
          %s290 = int_to_ptr.vmem [resolvable:$true] %s289
          %295 = dma.hbm_to_vmem [thread:$0]  %s288, 2048, %s290, %s279, 256, 128, 8
        $region36: #{tpu_custom_call.1} parent=31 // pred_fallthru
          _
        // Predicated region
        $region37: #{tpu_custom_call.1} parent=31 // pred_check
          %p296 = pneg %p142
        $region38: #{tpu_custom_call.1} parent=31 // pred_check_branch
          %298 = sbr.rel (%p296) target = $region40
        $region39: #{tpu_custom_call.1} parent=31 // pred_region
          %p299 = scmp.lt.s32.totalorder %s24, 1
          %s300 = scalar_select %p299, %s24, 1
          %s301 = scalar_lea.vmem %s4, %s300
        $region40: #{tpu_custom_call.1} parent=31 // pred_fallthru
          _
        // Predicated region
        $region41: #{tpu_custom_call.1} parent=31 // pred_check
          %p302 = pneg %p168
        $region42: #{tpu_custom_call.1} parent=31 // pred_check_branch
          %304 = sbr.rel (%p302) target = $region44
        $region43: #{tpu_custom_call.1} parent=31 // pred_region
          %s305 = sand.u32 %s16, 1
          %s306 = scalar_lea.sflag [#allocation5], %s305
          %s307 = sand.u32 %s158, 1
          %s308 = smul.addr %s307, 128
          %s309 = scalar_lea.vmem [#allocation10], %s308
          %s310 = smul.u32 16, %s24
          %312 = vsyncadd %s306, 0
          %s313 = smul.addr %s310, 8
          %s314 = scalar_lea.hbm %s5, %s313
          %s315 = sshll.u32 %s314, 4
          %s316 = int_to_ptr.hbm [resolvable:$true] %s315
          %s317 = sshll.u32 %s309, 4
          %s318 = int_to_ptr.vmem [resolvable:$true] %s317
          %323 = dma.hbm_to_vmem [thread:$0]  %s316, 2048, %s318, %s306, 128, 128, 8
        $region44: #{tpu_custom_call.1} parent=31 // pred_fallthru
          _
      $region32: #{tpu_custom_call.1} parent=5 // pred_fallthru
        _
      %p324 = scmp.le.s32.totalorder 1, %s16
      %p325 = scmp.lt.s32.totalorder %s16, 3
      %p326 = pnand %p324, %p325
      %p327 = pneg %p326
      // Predicated region
      $region45: #{tpu_custom_call.1} parent=5 // pred_check
        _
      $region46: #{tpu_custom_call.1} parent=5 // pred_check_branch
        %329 = sbr.rel (%p326) target = $region48
      $region47: #{tpu_custom_call.1} parent=5 // pred_region
        %s330 = ssub.s32 %s16, 1
        // Predicated region
        $region49: #{tpu_custom_call.1} parent=47 // pred_check
          %p331 = pneg %p54
        $region50: #{tpu_custom_call.1} parent=47 // pred_check_branch
          %333 = sbr.rel (%p331) target = $region52
        $region51: #{tpu_custom_call.1} parent=47 // pred_region
          %335 = dma.done [#allocation5], 256
        $region52: #{tpu_custom_call.1} parent=47 // pred_fallthru
          _
        // Predicated region
        $region53: #{tpu_custom_call.1} parent=47 // pred_check
          %p336 = pneg %p75
        $region54: #{tpu_custom_call.1} parent=47 // pred_check_branch
          %338 = sbr.rel (%p336) target = $region56
        $region55: #{tpu_custom_call.1} parent=47 // pred_region
          %340 = dma.done [#allocation8], 16
        $region56: #{tpu_custom_call.1} parent=47 // pred_fallthru
          _
        %s341 = sand.u32 %s21, 1
        %s342 = scalar_lea.sflag [#allocation5], %s341
        %s343 = sand.u32 %s109, 1
        %s344 = smul.addr %s343, 128
        %s345 = scalar_lea.vmem [#allocation9], %s344
        // Predicated region
        $region57: #{tpu_custom_call.1} parent=47 // pred_check
          %p346 = pneg %p122
        $region58: #{tpu_custom_call.1} parent=47 // pred_check_branch
          %348 = sbr.rel (%p346) target = $region60
        $region59: #{tpu_custom_call.1} parent=47 // pred_region
          %350 = dma.done %s342, 2048
        $region60: #{tpu_custom_call.1} parent=47 // pred_fallthru
          _
        %s351 = sand.u32 %s21, 1
        %s352 = scalar_lea.sflag [#allocation5], %s351
        %s353 = sand.u32 %s161, 1
        %s354 = smul.addr %s353, 128
        %s355 = scalar_lea.vmem [#allocation10], %s354
        // Predicated region
        $region61: #{tpu_custom_call.1} parent=47 // pred_check
          %p356 = pneg %p174
        $region62: #{tpu_custom_call.1} parent=47 // pred_check_branch
          %358 = sbr.rel (%p356) target = $region64
        $region63: #{tpu_custom_call.1} parent=47 // pred_region
          %360 = dma.done %s352, 2048
        $region64: #{tpu_custom_call.1} parent=47 // pred_fallthru
          _
        %p361 = pneg %p54
        %p362 = pneg %p51
        %p363 = pneg %p75
        %p364 = pneg %p72
        %p365 = pneg %p96
        %p366 = pneg %p93
        %s367 = sand.u32 %s21, 1
        %s368 = scalar_lea.sflag [#allocation5], %s367
        %s369 = sand.u32 %s109, 1
        %s370 = smul.addr %s369, 128
        %s371 = scalar_lea.vmem [#allocation9], %s370
        %p372 = pneg %p122
        %p373 = pneg %p119
        %p374 = scmp.lt.s32.totalorder %s26, 1
        %s375 = scalar_select %p374, %s26, 1
        %s376 = scalar_lea.vmem %s4, %s375
        %p377 = pneg %p148
        %p378 = pneg %p145
        %s379 = sand.u32 %s21, 1
        %s380 = scalar_lea.sflag [#allocation5], %s379
        %s381 = sand.u32 %s161, 1
        %s382 = smul.addr %s381, 128
        %s383 = scalar_lea.vmem [#allocation10], %s382
        %p384 = pneg %p174
        %p385 = pneg %p171
        %p386 = pneg %p195
        %p387 = pneg %p192
        %p388 = pneg %p221
        %p389 = pneg %p218
        %s390 = smul.u32 2, %s25
        %p391 = scmp.lt.s32.totalorder %s26, 1
        %s392 = scalar_select %p391, %s26, 1
        %s393 = scalar_lea.vmem %s4, %s392
        %s394 = smul.u32 16, %s26
        %s395 = smul.u32 2, %s25
        %p396 = scmp.eq.s32.totalorder %s26, 0
        // Predicated region
        $region65: #{tpu_custom_call.1} parent=47 // pred_check
          %p397 = pneg %p396
        $region66: #{tpu_custom_call.1} parent=47 // pred_check_branch
          %399 = sbr.rel (%p397) target = $region68
        $region67: #{tpu_custom_call.1} parent=47 // pred_region
          %v400 = vld [vmem:[#allocation4] sm:$0xff]
          %v401 = vld [vmem:[#allocation4 + $0x8] sm:$0xff]
          %402 = vadd.xlane.f32.xlu0 %v400
          %v403 = vpop.xlane.xlu0 %402
          %404 = vadd.xlane.f32.xlu0 %v401
          %v405 = vpop.xlane.xlu0 %404
          %v406 = vrcp.pop 128.0
          %v407 = vmul.f32 128.0, %v406
          %v408 = vsub.f32 1.0, %v407
          %v409 = vmul.f32 %v406, %v408
          %v410 = vadd.f32 %v406, %v409
          %vm411 = vweird.f32 %v406
          %v412 = vsel %vm411, %v406, %v410
          %v413 = vmul.f32 %v403, %v412
          %v414 = vmul.f32 %v405, %v412
          %v415 = vsub.f32 %v400, %v413
          %v416 = vsub.f32 %v401, %v414
          %v417 = vmul.f32 %v415, %v415
          %v418 = vmul.f32 %v416, %v416
          %419 = vadd.xlane.f32.xlu0 %v417
          %v420 = vpop.xlane.xlu0 %419
          %421 = vadd.xlane.f32.xlu0 %v418
          %v422 = vpop.xlane.xlu0 %421
          %v423 = vmul.f32 %v420, %v412
          %v424 = vmul.f32 %v422, %v412
          %v425 = vadd.f32 %v423, 1e-05
          %v426 = vadd.f32 %v424, 1e-05
          %v427 = vrsqrt.pop %v425
          %v428 = vmul.f32 %v427, %v425
          %v429 = vmul.f32 %v428, %v427
          %v430 = vmul.f32 0.5, %v429
          %v431 = vsub.f32 1.5, %v430
          %v432 = vmul.f32 %v427, %v431
          %vm433 = vweird.f32 %v425
          %vm434 = vweird.f32 %v427
          %vm435 = vmor %vm433, %vm434
          %v436 = vsel %vm435, %v427, %v432
          %v437 = vrsqrt.pop %v426
          %v438 = vmul.f32 %v437, %v426
          %v439 = vmul.f32 %v438, %v437
          %v440 = vmul.f32 0.5, %v439
          %v441 = vsub.f32 1.5, %v440
          %v442 = vmul.f32 %v437, %v441
          %vm443 = vweird.f32 %v426
          %vm444 = vweird.f32 %v437
          %vm445 = vmor %vm443, %vm444
          %v446 = vsel %vm445, %v437, %v442
          %v447 = vmul.f32 %v415, %v436
          %v448 = vmul.f32 %v416, %v446
          %v449 = vld [vmem:[#allocation7] sm:$0x1]
          %v451 = vperm.slane %v449, 0
          %v453 = vmul.f32 %v447, %v451
          %v454 = vmul.f32 %v448, %v451
          %v455 = vld [vmem:[%s2] sm:$0x1]
          %v457 = vperm.slane %v455, 0
          %v459 = vadd.f32 %v453, %v457
          %v460 = vadd.f32 %v454, %v457
          %461 = vst [vmem:[#allocation2] sm:$0xff] %v459
          %462 = vst [vmem:[#allocation2 + $0x8] sm:$0xff] %v460
          %v463 = vld [vmem:[%s6] sm:$0x1]
          %v465 = vperm.slane %v463, 0
          %v467 = vadd.f32 %v400, %v465
          %v468 = vadd.f32 %v401, %v465
          %469 = vst [vmem:[#allocation3] sm:$0xff] %v467
          %470 = vst [vmem:[#allocation3 + $0x8] sm:$0xff] %v468
        $region68: #{tpu_custom_call.1} parent=47 // pred_fallthru
          _
        %v471 = vld [vmem:[#allocation2] sm:$0xff]
        %v472 = vld [vmem:[#allocation2 + $0x8] sm:$0xff]
        %v473 = vld [vmem:[%s345] sm:$0xff]
        %v474 = vld [vmem:[%s345 + $0x8] sm:$0xff]
        %v475 = vld [vmem:[%s345 + $0x10] sm:$0xff]
        %v476 = vld [vmem:[%s345 + $0x18] sm:$0xff]
        %v477 = vld [vmem:[%s345 + $0x20] sm:$0xff]
        %v478 = vld [vmem:[%s345 + $0x28] sm:$0xff]
        %v479 = vld [vmem:[%s345 + $0x30] sm:$0xff]
        %v480 = vld [vmem:[%s345 + $0x38] sm:$0xff]
        %v481 = vld [vmem:[%s345 + $0x40] sm:$0xff]
        %v482 = vld [vmem:[%s345 + $0x48] sm:$0xff]
        %v483 = vld [vmem:[%s345 + $0x50] sm:$0xff]
        %v484 = vld [vmem:[%s345 + $0x58] sm:$0xff]
        %v485 = vld [vmem:[%s345 + $0x60] sm:$0xff]
        %v486 = vld [vmem:[%s345 + $0x68] sm:$0xff]
        %v487 = vld [vmem:[%s345 + $0x70] sm:$0xff]
        %v488 = vld [vmem:[%s345 + $0x78] sm:$0xff]
        %v489 = vld [vmem:[%s393] sm:$0x1]
        %v491 = vperm.slane %v489, 0
        %493 = vmatpush.msra.mxu0 %v488
        %494 = vmatpush.msra.mxu0 %v487
        %495 = vmatpush.msra.mxu0 %v486
        %496 = vmatpush.msra.mxu0 %v485
        %497 = vmatpush.msra.mxu0 %v484
        %498 = vmatpush.msra.mxu0 %v483
        %499 = vmatpush.msra.mxu0 %v482
        %500 = vmatpush.msra.mxu0 %v481
        %501 = vmatpush.msra.mxu0 %v480
        %502 = vmatpush.msra.mxu0 %v479
        %503 = vmatpush.msra.mxu0 %v478
        %504 = vmatpush.msra.mxu0 %v477
        %505 = vmatpush.msra.mxu0 %v476
        %506 = vmatpush.msra.mxu0 %v475
        %507 = vmatpush.msra.mxu0 %v474
        %508 = vmatpush.msra.mxu0 %v473
        %509 = vmatmul.f32.gmra.mxu0 %v471
        %v510 = vpop.f32.mrf.mxu0
        %v511 = vadd.f32 %v491, %v510
        %512 = vmatmul.f32.gmra.mxu0 %v472
        %v513 = vpop.f32.mrf.mxu0
        %v514 = vadd.f32 %v491, %v513
        %515 = vdwg.mxu0
        %v516 = vmax.f32 %v511, 0.0
        %v517 = vmax.f32 %v514, 0.0
        %v518 = vld [vmem:[#allocation3] sm:$0xff]
        %v519 = vld [vmem:[#allocation3 + $0x8] sm:$0xff]
        %v520 = vld [vmem:[%s355] sm:$0xff]
        %v521 = vld [vmem:[%s355 + $0x8] sm:$0xff]
        %v522 = vld [vmem:[%s355 + $0x10] sm:$0xff]
        %v523 = vld [vmem:[%s355 + $0x18] sm:$0xff]
        %v524 = vld [vmem:[%s355 + $0x20] sm:$0xff]
        %v525 = vld [vmem:[%s355 + $0x28] sm:$0xff]
        %v526 = vld [vmem:[%s355 + $0x30] sm:$0xff]
        %v527 = vld [vmem:[%s355 + $0x38] sm:$0xff]
        %v528 = vld [vmem:[%s355 + $0x40] sm:$0xff]
        %v529 = vld [vmem:[%s355 + $0x48] sm:$0xff]
        %v530 = vld [vmem:[%s355 + $0x50] sm:$0xff]
        %v531 = vld [vmem:[%s355 + $0x58] sm:$0xff]
        %v532 = vld [vmem:[%s355 + $0x60] sm:$0xff]
        %v533 = vld [vmem:[%s355 + $0x68] sm:$0xff]
        %v534 = vld [vmem:[%s355 + $0x70] sm:$0xff]
        %v535 = vld [vmem:[%s355 + $0x78] sm:$0xff]
        %536 = vmatpush.msra.mxu0 %v535
        %537 = vmatpush.msra.mxu0 %v534
        %538 = vmatpush.msra.mxu0 %v533
        %539 = vmatpush.msra.mxu0 %v532
        %540 = vmatpush.msra.mxu0 %v531
        %541 = vmatpush.msra.mxu0 %v530
        %542 = vmatpush.msra.mxu0 %v529
        %543 = vmatpush.msra.mxu0 %v528
        %544 = vmatpush.msra.mxu0 %v527
        %545 = vmatpush.msra.mxu0 %v526
        %546 = vmatpush.msra.mxu0 %v525
        %547 = vmatpush.msra.mxu0 %v524
        %548 = vmatpush.msra.mxu0 %v523
        %549 = vmatpush.msra.mxu0 %v522
        %550 = vmatpush.msra.mxu0 %v521
        %551 = vmatpush.msra.mxu0 %v520
        %552 = vmatmul.f32.gmra.mxu0 %v516
        %v553 = vpop.f32.mrf.mxu0
        %v554 = vadd.f32 0.0, %v553
        %555 = vmatmul.f32.gmra.mxu0 %v517
        %v556 = vpop.f32.mrf.mxu0
        %v557 = vadd.f32 0.0, %v556
        %558 = vdwg.mxu0
        %v559 = vadd.f32 %v518, %v554
        %v560 = vadd.f32 %v519, %v557
        %561 = vst [vmem:[#allocation3] sm:$0xff] %v559
        %562 = vst [vmem:[#allocation3 + $0x8] sm:$0xff] %v560
        %p563 = scmp.eq.s32.totalorder %s26, 1
        // Predicated region
        $region69: #{tpu_custom_call.1} parent=47 // pred_check
          %p564 = pneg %p563
        $region70: #{tpu_custom_call.1} parent=47 // pred_check_branch
          %566 = sbr.rel (%p564) target = $region72
        $region71: #{tpu_custom_call.1} parent=47 // pred_region
          %v567 = vld [vmem:[#allocation3] sm:$0xff]
          %v568 = vld [vmem:[#allocation3 + $0x8] sm:$0xff]
          %569 = vst [vmem:[#allocation11] sm:$0xff] %v567
          %570 = vst [vmem:[#allocation11 + $0x8] sm:$0xff] %v568
        $region72: #{tpu_custom_call.1} parent=47 // pred_fallthru
          _
        // Predicated region
        $region73: #{tpu_custom_call.1} parent=47 // pred_check
          %p571 = pneg %p218
        $region74: #{tpu_custom_call.1} parent=47 // pred_check_branch
          %573 = sbr.rel (%p571) target = $region76
        $region75: #{tpu_custom_call.1} parent=47 // pred_region
          %s574 = smul.u32 2, %s25
          %576 = vsyncadd [#allocation6], 0
          %s577 = smul.addr %s574, 8
          %s578 = scalar_lea.hbm %s7, %s577
          %s579 = sshll.u32 [#allocation11], 4
          %s580 = int_to_ptr.vmem [resolvable:$true] %s579
          %s581 = sshll.u32 %s578, 4
          %s582 = int_to_ptr.hbm [resolvable:$true] %s581
          %587 = dma.vmem_to_hbm [thread:$0]  %s580, 256, %s582, [#allocation6], 128, 128, 8
        $region76: #{tpu_custom_call.1} parent=47 // pred_fallthru
          _
        // Predicated region
        $region77: #{tpu_custom_call.1} parent=47 // pred_check
          %p588 = pneg %p218
        $region78: #{tpu_custom_call.1} parent=47 // pred_check_branch
          %590 = sbr.rel (%p588) target = $region80
        $region79: #{tpu_custom_call.1} parent=47 // pred_region
          %592 = dma.done [#allocation6], 256
        $region80: #{tpu_custom_call.1} parent=47 // pred_fallthru
          _
      $region48: #{tpu_custom_call.1} parent=5 // pred_fallthru
        _
      %p593 = scmp.le.s32.totalorder 2, %s16
      // Predicated region
      $region81: #{tpu_custom_call.1} parent=5 // pred_check
        %p594 = pneg %p593
      $region82: #{tpu_custom_call.1} parent=5 // pred_check_branch
        %596 = sbr.rel (%p594) target = $region84
      $region83: #{tpu_custom_call.1} parent=5 // pred_region
        %s597 = ssub.s32 %s16, 2
      $region84: #{tpu_custom_call.1} parent=5 // pred_fallthru
        _
    $region6: #{tpu_custom_call.1} parent=1 // loop_footer
      %s20 = sadd.s32 1, %s16
    $region7: #{tpu_custom_call.1} parent=1 // loop_footer_branch
      %15 = sbr.rel target = $region3
    $region8: #{tpu_custom_call.1} parent=1 // loop_exit
      _
    %598 = vsyncpa [#allocation5], 1
    %s599 = scalar_lea.sflag [#allocation5], 1
    %600 = vsyncpa %s599, 1
    %601 = vsyncpa [#allocation8], 1
    %602 = vsyncpa [#allocation6], 1
    %s603 = scalar_lea.sflag [#allocation6], 1
    %604 = vsyncpa %s603, 1

</llo_original>
